<compile_context>
chip_gen: v5e
topology: v5e:2x2
jax: 0.10.0
libtpu: 0.0.40
codegen_flags: <defaults>
</compile_context>

<pallas_src>
import math

import jax
import jax.numpy as jnp
from jax.experimental import pallas as pl
from jax.experimental.pallas import tpu as pltpu


# ----------------------------------------------------------------------------
# Constant buffer (matches the PyTorch module's registered `pe` buffer).
# ----------------------------------------------------------------------------
def _build_pe(max_len: int, d_model: int) -> jnp.ndarray:
    """Sinusoidal positional-encoding buffer, shape (max_len, d_model), f32."""
    position = jnp.arange(0, max_len, dtype=jnp.float32)[:, None]          # (L, 1)
    div_term = jnp.exp(
        jnp.arange(0, d_model, 2, dtype=jnp.float32)
        * -(math.log(10000.0) / d_model)
    )                                                                       # (D/2,)
    pe = jnp.zeros((max_len, d_model), dtype=jnp.float32)
    pe = pe.at[:, 0::2].set(jnp.sin(position * div_term))
    pe = pe.at[:, 1::2].set(jnp.cos(position * div_term))
    return pe


# ----------------------------------------------------------------------------
# Kernel: broadcast add (pe block broadcasts across batch rows / sublanes).
# ----------------------------------------------------------------------------
def _pe_add_kernel(x_ref, pe_ref, o_ref):
    # Add in the promoted dtype (PyTorch adds the float32 pe buffer), then
    # cast to the output dtype.
    o_ref[...] = (x_ref[...] + pe_ref[...]).astype(o_ref.dtype)


# ----------------------------------------------------------------------------
# Trace-time helpers (pure Python, no device work).
# ----------------------------------------------------------------------------
def _roundup(v, m):
    return ((v + m - 1) // m) * m


def _sublane(itemsize):
    # Minimum VMEM/vreg sublane-tile height for a dtype of `itemsize` bytes
    # (f32: 8, bf16: 16, int8: 32).  Blocks are physically padded to this.
    return max(8, 32 // max(1, itemsize))


def _largest_aligned_divisor(n, align, cap):
    """Largest divisor d of n with d % align == 0 and d <= cap (None if none)."""
    best = None
    i = 1
    while i * i <= n:
        if n % i == 0:
            for d in (i, n // i):
                if d % align == 0 and d <= cap and (best is None or d > best):
                    best = d
        i += 1
    return best


def _vmem_budget():
    """(per-step double-buffered footprint target, scoped vmem limit) bytes."""
    vmem = None
    try:
        vmem = getattr(pltpu.get_tpu_info(), "vmem_capacity_bytes", None)
    except Exception:
        vmem = None
    if not vmem:
        vmem = 64 * 1024 * 1024          # conservative: v7x-sized part
    target = vmem // 4                   # 16 MiB on v7x, 32 MiB on v5e/v6e
    limit = min(vmem // 2, 96 * 1024 * 1024)
    return int(target), int(limit)


def _maybe_split_for_megacore(lt, n_steps, x_bytes):
    # Create a second grid step only when each half still moves >= ~2 MiB
    # (useful for v7x's two TensorCores; at that size the extra ~0.35 us step
    # is noise on single-TC v5e/v6e, and below it the split is pure overhead).
    if n_steps < 2 and lt % 256 == 0 and x_bytes >= 4 * 1024 * 1024:
        return lt // 2
    return lt


# ----------------------------------------------------------------------------
# Wrapper
# ----------------------------------------------------------------------------
def positional_encoding_forward(x: jnp.ndarray, pe: jnp.ndarray) -> jnp.ndarray:
    """x: (B, S, D); pe: (max_len, D).  Returns x + pe[:S] (dropout = identity)."""
    B, S, D = x.shape
    if S > pe.shape[0]:
        raise ValueError(f"sequence length {S} exceeds max_len {pe.shape[0]}")

    pe_s = pe[:S, :]                                  # keep float32 (PyTorch parity)
    out_dtype = jnp.promote_types(x.dtype, pe_s.dtype)

    x_elt = jnp.dtype(x.dtype).itemsize
    out_elt = jnp.dtype(out_dtype).itemsize
    pe_elt = jnp.dtype(pe_s.dtype).itemsize
    sub_x, sub_o, sub_p = _sublane(x_elt), _sublane(out_elt), _sublane(pe_elt)

    n = S * D
    vmem_target, vmem_limit = _vmem_budget()
    x_bytes = B * n * x_elt
    cost = pl.CostEstimate(
        flops=B * n,
        transcendentals=0,
        bytes_accessed=B * n * x_elt + n * pe_elt + B * n * out_elt,
    )
    alias = {0: 0} if out_dtype == x.dtype else {}

    def _call_2d(x2, pe2, grid, x_spec, pe_spec, out_spec, semantics):
        return pl.pallas_call(
            _pe_add_kernel,
            out_shape=jax.ShapeDtypeStruct(x2.shape, out_dtype),
            grid_spec=pltpu.PrefetchScalarGridSpec(
                num_scalar_prefetch=0,
                grid=grid,
                in_specs=[x_spec, pe_spec],
                out_specs=out_spec,
            ),
            compiler_params=pltpu.CompilerParams(
                dimension_semantics=semantics,
                vmem_limit_bytes=vmem_limit,
            ),
            cost_estimate=cost,
            input_output_aliases=alias,
        )(x2, pe2)

    # ------------------------------------------------------------------
    # Lane-dense fast paths (S*D divisible by 128).
    # ------------------------------------------------------------------
    if n % 128 == 0:
        if B < sub_x and n % (128 * sub_x) == 0:
            # Small batch: fold `sub_x` contiguous chunks of each flattened
            # row into the sublane axis so blocks are a full sublane group
            # high (dense vregs / VMEM tiles instead of up-to-4x padding).
            rows = sub_x
            m = n // rows
            x2 = x.reshape(B * rows, m)
            pe2 = pe_s.reshape(rows, m)
            per_lane = (2 * rows * x_elt
                        + 2 * _roundup(rows, sub_o) * out_elt
                        + 2 * _roundup(rows, sub_p) * pe_elt)
            cap = max(128, vmem_target // per_lane)
            lt = _largest_aligned_divisor(m, 128, cap) or 128
            lt = _maybe_split_for_megacore(lt, (m // lt) * B, x_bytes)
            grid = (m // lt, B)          # batch innermost -> pe block reused
            out2 = _call_2d(
                x2, pe2, grid,
                pl.BlockSpec((rows, lt), lambda j, i: (i, j)),
                pl.BlockSpec((rows, lt), lambda j, i: (0, j)),
                pl.BlockSpec((rows, lt), lambda j, i: (i, j)),
                ("parallel", "parallel"))
            return out2.reshape(B, S, D)

        # General case: all (or many) batch rows per block, wide lane tiles.
        x2 = x.reshape(B, n)
        pe2 = pe_s.reshape(1, n)
        rt = B
        if B > 256:
            cand = _largest_aligned_divisor(B, sub_x, 256)
            if cand is not None:
                rt = cand
        per_lane = (2 * _roundup(rt, sub_x) * x_elt
                    + 2 * _roundup(rt, sub_o) * out_elt
                    + 2 * sub_p * pe_elt)
        cap = max(128, vmem_target // per_lane)
        lt = _largest_aligned_divisor(n, 128, cap) or 128
        lt = _maybe_split_for_megacore(lt, (B // rt) * (n // lt), x_bytes)
        grid = (B // rt, n // lt)
        out2 = _call_2d(
            x2, pe2, grid,
            pl.BlockSpec((rt, lt), lambda i, j: (i, j)),
            pl.BlockSpec((1, lt), lambda i, j: (0, j)),
            pl.BlockSpec((rt, lt), lambda i, j: (i, j)),
            ("parallel", "parallel"))
        return out2.reshape(B, S, D)

    # ------------------------------------------------------------------
    # Fallback: S*D not a multiple of 128.  Still lane-dense: full-extent
    # lane block (legal when it equals the full array dim) over grouped
    # batch rows, so masking is confined to the single ragged lane tail.
    # ------------------------------------------------------------------
    def _fits(rt_):
        return n * (2 * _roundup(rt_, sub_x) * x_elt
                    + 2 * _roundup(rt_, sub_o) * out_elt
                    + 2 * sub_p * pe_elt) <= vmem_target

    rt = B if _fits(B) else None
    if rt is None:
        # Largest multiple-of-8 divisor of B whose blocks fit the budget.
        best = None
        i = 1
        while i * i <= B:
            if B % i == 0:
                for d in (i, B // i):
                    if d % 8 == 0 and _fits(d) and (best is None or d > best):
                        best = d
            i += 1
        rt = best

    if rt is not None:
        x2 = x.reshape(B, n)
        pe2 = pe_s.reshape(1, n)
        grid = (B // rt,)
        out2 = _call_2d(
            x2, pe2, grid,
            pl.BlockSpec((rt, n), lambda i: (i, 0)),
            pl.BlockSpec((1, n), lambda i: (0, 0)),
            pl.BlockSpec((rt, n), lambda i: (i, 0)),
            ("parallel",))
        return out2.reshape(B, S, D)

    # Last resort (huge B with non-aligned n): one full-extent (1, S, D)
    # block per batch element.
    pe_3d = pe_s.reshape(1, S, D)
    return pl.pallas_call(
        _pe_add_kernel,
        out_shape=jax.ShapeDtypeStruct((B, S, D), out_dtype),
        grid_spec=pltpu.PrefetchScalarGridSpec(
            num_scalar_prefetch=0,
            grid=(B,),
            in_specs=[pl.BlockSpec((1, S, D), lambda b: (b, 0, 0)),
                      pl.BlockSpec((1, S, D), lambda b: (0, 0, 0))],
            out_specs=pl.BlockSpec((1, S, D), lambda b: (b, 0, 0)),
        ),
        compiler_params=pltpu.CompilerParams(
            dimension_semantics=("parallel",),
            vmem_limit_bytes=vmem_limit,
        ),
        cost_estimate=cost,
        input_output_aliases=alias,
    )(x, pe_3d)


# ----------------------------------------------------------------------------
# Self-test (refs are computed BEFORE each kernel call because x is donated).
# ----------------------------------------------------------------------------
if __name__ == "__main__":
    d_model = 32
    max_len = 5000
    dropout_p = 0.1  # unused at inference (identity)

    pe = _build_pe(max_len, d_model)

    # Case 1: module-default small shapes (fast path, single block).
    x1 = jax.random.normal(jax.random.PRNGKey(0), (2, 8, d_model), jnp.float32)
    ref1 = x1 + pe[None, :8, :]
    out1 = jax.block_until_ready(positional_encoding_forward(x1, pe))
    assert out1.shape == ref1.shape and out1.dtype == ref1.dtype
    assert jnp.allclose(out1, ref1, atol=1e-6, rtol=1e-6)

    # Case 2: small batch, longer sequence -> sublane-densified fold path.
    x2 = jax.random.normal(jax.random.PRNGKey(1), (2, 64, d_model), jnp.float32)
    ref2 = x2 + pe[None, :64, :]
    out2 = jax.block_until_ready(positional_encoding_forward(x2, pe))
    assert jnp.allclose(out2, ref2, atol=1e-6, rtol=1e-6)

    # Case 3: odd batch (row block equals full batch dim).
    x3 = jax.random.normal(jax.random.PRNGKey(2), (3, 16, d_model), jnp.float32)
    ref3 = x3 + pe[None, :16, :]
    out3 = jax.block_until_ready(positional_encoding_forward(x3, pe))
    assert jnp.allclose(out3, ref3, atol=1e-6, rtol=1e-6)

    # Case 4: S*D not a multiple of 128 -> lane-dense fallback (single block).
    pe24 = _build_pe(max_len, 24)
    x4 = jax.random.normal(jax.random.PRNGKey(3), (5, 3, 24), jnp.float32)
    ref4 = x4 + pe24[None, :3, :]
    out4 = jax.block_until_ready(positional_encoding_forward(x4, pe24))
    assert jnp.allclose(out4, ref4, atol=1e-6, rtol=1e-6)

    # Case 5: bf16 input promotes against the float32 pe buffer (PyTorch parity).
    x5 = jax.random.normal(jax.random.PRNGKey(4), (2, 8, d_model)).astype(jnp.bfloat16)
    ref5 = x5 + pe[None, :8, :]
    out5 = jax.block_until_ready(positional_encoding_forward(x5, pe))
    assert out5.dtype == jnp.float32
    assert jnp.allclose(out5, ref5, atol=1e-5, rtol=1e-5)

    print("KERNEL_OK")
</pallas_src>

<mosaic_0001>
module attributes {stable_mosaic.version = 11 : i64} {
  func.func @_pe_add_kernel(%arg0: i32, %arg1: i32, %arg2: memref<2x256xf32, #tpu.memory_space<vmem>>, %arg3: memref<1x256xf32, #tpu.memory_space<vmem>>, %arg4: memref<2x256xf32, #tpu.memory_space<vmem>>) attributes {dimension_semantics = [#tpu.dimension_semantics<parallel>, #tpu.dimension_semantics<parallel>], iteration_bounds = array<i64: 1, 1>, scalar_prefetch = 0 : i64, scratch_operands = 0 : i64, tpu.core_type = #tpu.core_type<tc>, window_params = [{transform_indices = @transform_0, window_bounds = array<i64: 2, 256>}, {transform_indices = @transform_1, window_bounds = array<i64: 1, 256>}, {transform_indices = @transform_2, window_bounds = array<i64: 2, 256>}]} {
    %c0 = arith.constant 0 : index
    %c0_0 = arith.constant 0 : index
    %0 = vector.load %arg2[%c0, %c0_0] : memref<2x256xf32, #tpu.memory_space<vmem>>, vector<2x256xf32>
    %c0_1 = arith.constant 0 : index
    %c0_2 = arith.constant 0 : index
    %1 = vector.load %arg3[%c0_1, %c0_2] : memref<1x256xf32, #tpu.memory_space<vmem>>, vector<1x256xf32>
    %2 = vector.broadcast %1 : vector<1x256xf32> to vector<2x256xf32>
    %3 = arith.addf %0, %2 : vector<2x256xf32>
    %c0_3 = arith.constant 0 : index
    %c0_4 = arith.constant 0 : index
    %4 = vector.load %arg4[%c0_3, %c0_4] : memref<2x256xf32, #tpu.memory_space<vmem>>, vector<2x256xf32>
    tpu.vector_store %arg4[%c0_3, %c0_4], %3 {strides = array<i32>} : memref<2x256xf32, #tpu.memory_space<vmem>>, vector<2x256xf32>,
    return
  }
  func.func @transform_0(%arg0: i32, %arg1: i32) -> (i32, i32) {
    %c0_i32 = arith.constant 0 : i32
    return %arg0, %arg1 : i32, i32
  }
  func.func @transform_1(%arg0: i32, %arg1: i32) -> (i32, i32) {
    %c0_i32 = arith.constant 0 : i32
    %c0_i32_0 = arith.constant 0 : i32
    return %c0_i32, %arg1 : i32, i32
  }
  func.func @transform_2(%arg0: i32, %arg1: i32) -> (i32, i32) {
    %c0_i32 = arith.constant 0 : i32
    return %arg0, %arg1 : i32, i32
  }
}

</mosaic_0001>

<llo_original>
// kernel: tpu_custom_call.1
$region0: #{tpu_custom_call.1}
  #allocation0 [shape = 'u32[]', space=smem, size = 0x4, offset = 0x4, fixed_abs, tag = 'smem constant byte address 0x4 - core index']
  #allocation1 [shape = 'u32[72,128]{1,0:T(1,128)}', space=vmem, size = 0x9000, scoped, tag = 'internal scratch']
  %s0 = inlined_call_operand.hbm [shape: f32[2,256], index: 0, kind: input, shape index: {}, may-alias: {0,2}]
  %s1 = inlined_call_operand.vmem [shape: f32[1,256], index: 1, kind: input, shape index: {}]
  %s2 = inlined_call_operand.hbm [shape: f32[2,256], index: 2, kind: output, shape index: {}, may-alias: {0,2}]
  %s3 = sld [smem:[#allocation0]]
  $region22: #{tpu_custom_call.1} parent=0
    _
  %s5 = ssub.s32 1, %s3
  %s6 = scalar_select 0, %s5, %s3
  $region1: #{tpu_custom_call.1} parent=0
    #allocation2 [shape = 'u8[2048]{0}', space=vmem, size = 0x800, scoped, tag = 'input window, operand 0, single buffered']
    #allocation3 [shape = 's32[1]{0}', space=sflag, size = 0x4, scoped, tag = 'scoped memory for tpu_custom_call.1']
    #allocation4 [shape = 's32[1]{0}', space=sflag, size = 0x4, scoped, tag = 'scoped memory for tpu_custom_call.1']
    #allocation5 [shape = 'u8[2048]{0}', space=vmem, size = 0x800, scoped, tag = 'output window, operand 0, single buffered']
    %7 = vsyncpa [#allocation3], 0
    %8 = vsyncpa [#allocation4], 0
    // Predicated region
    $region2: #{tpu_custom_call.1} parent=1 // pred_check
      _
    $region3: #{tpu_custom_call.1} parent=1 // pred_check_branch
      %10 = sbr.rel (0) target = $region5
    $region4: #{tpu_custom_call.1} parent=1 // pred_region
      %12 = vsyncadd [#allocation3], 0
      %s14 = sshll.u32 %s0, 4
      %s15 = int_to_ptr.hbm [resolvable:$true] %s14
      %s16 = sshll.u32 [#allocation2], 4
      %s17 = int_to_ptr.vmem [resolvable:$true] %s16
      %19 = dma.hbm_to_vmem [thread:$0]  %s15, 64, %s17, [#allocation3]
    $region5: #{tpu_custom_call.1} parent=1 // pred_fallthru
      _
    // Predicated region
    $region6: #{tpu_custom_call.1} parent=1 // pred_check
      _
    $region7: #{tpu_custom_call.1} parent=1 // pred_check_branch
      %21 = sbr.rel (0) target = $region9
    $region8: #{tpu_custom_call.1} parent=1 // pred_region
      _
    $region9: #{tpu_custom_call.1} parent=1 // pred_fallthru
      _
    // Predicated region
    $region10: #{tpu_custom_call.1} parent=1 // pred_check
      _
    $region11: #{tpu_custom_call.1} parent=1 // pred_check_branch
      %23 = sbr.rel (0) target = $region13
    $region12: #{tpu_custom_call.1} parent=1 // pred_region
      %25 = dma.done [#allocation3], 64
    $region13: #{tpu_custom_call.1} parent=1 // pred_fallthru
      _
    %v26 = vld [vmem:[#allocation2] sm:$0xf]
    %v27 = vld [vmem:[%s1] sm:$0x3]
    %v29 = vperm.slane %v27, 0
    %v30 = vperm.slane %v27, 1
    %v31 = vrot.slane %v30, 6
    %vm32 = vcmask 1041408
    %v33 = vsel %vm32, %v29, %v31
    %v35 = vadd.f32 %v26, %v33
    %36 = vst [vmem:[#allocation5] sm:$0xf] %v35
    // Predicated region
    $region14: #{tpu_custom_call.1} parent=1 // pred_check
      _
    $region15: #{tpu_custom_call.1} parent=1 // pred_check_branch
      %38 = sbr.rel (0) target = $region17
    $region16: #{tpu_custom_call.1} parent=1 // pred_region
      %40 = vsyncadd [#allocation4], 0
      %s42 = sshll.u32 [#allocation5], 4
      %s43 = int_to_ptr.vmem [resolvable:$true] %s42
      %s44 = sshll.u32 %s2, 4
      %s45 = int_to_ptr.hbm [resolvable:$true] %s44
      %47 = dma.vmem_to_hbm [thread:$0]  %s43, 64, %s45, [#allocation4]
    $region17: #{tpu_custom_call.1} parent=1 // pred_fallthru
      _
    // Predicated region
    $region18: #{tpu_custom_call.1} parent=1 // pred_check
      _
    $region19: #{tpu_custom_call.1} parent=1 // pred_check_branch
      %49 = sbr.rel (0) target = $region21
    $region20: #{tpu_custom_call.1} parent=1 // pred_region
      %51 = dma.done [#allocation4], 64
    $region21: #{tpu_custom_call.1} parent=1 // pred_fallthru
      _
    %52 = vsyncpa [#allocation3], 1
    %53 = vsyncpa [#allocation4], 1

</llo_original>
